<compile_context>
chip_gen: v7x
topology: tpu7x:2x2x1
jax: 0.10.0
libtpu: 0.0.40
codegen_flags: <defaults>
</compile_context>

<pallas_src>
import jax
import jax.numpy as jnp
from jax.experimental import pallas as pl
from jax.experimental.pallas import tpu as pltpu

HIDDEN = 128


def _round_up(x, m):
    return (x + m - 1) // m * m


def _critic_td3_kernel(s_ref, a_ref, w1s_ref, w1a_ref, b1_ref,
                       w2_ref, b2_ref, w3_ref, b3_ref, out_ref):
    """Fused 3-layer MLP on one (tb, .) batch tile. bf16 MXU, f32 accumulate."""
    # Layer 1: split-K matmul replaces cat(state, action). bf16 inputs, f32 acc.
    s_bf = s_ref[...].astype(jnp.bfloat16)
    a_bf = a_ref[...].astype(jnp.bfloat16)
    h1 = jnp.dot(s_bf, w1s_ref[...], preferred_element_type=jnp.float32)
    h1 = h1 + jnp.dot(a_bf, w1a_ref[...], preferred_element_type=jnp.float32)
    h1 = jnp.maximum(h1 + b1_ref[...], 0.0)

    # Layer 2.
    h2 = jnp.dot(h1.astype(jnp.bfloat16), w2_ref[...],
                 preferred_element_type=jnp.float32)
    h2 = jnp.maximum(h2 + b2_ref[...], 0.0)

    # Output head (N=1): VPU multiply + lane reduce instead of an MXU pass.
    v = jnp.sum(h2 * w3_ref[...], axis=-1, keepdims=True)
    out_ref[...] = (v + b3_ref[0]).astype(out_ref.dtype)


def _vmem_block_bytes(tb, state_dim, action_dim, hidden):
    """Rough scoped-VMEM footprint: double-buffered, lane-padded blocks."""
    lane = 128
    pad = lambda d: _round_up(max(d, 1), lane)
    io = 2 * tb * (pad(state_dim) + pad(action_dim) + pad(1)) * 4  # f32 tiles
    w = 2 * ((state_dim + action_dim) * hidden * 2      # W1_s / W1_a (bf16)
             + hidden * hidden * 2                      # W2 (bf16)
             + 3 * hidden * 4 + hidden * 4)             # b1, b2, w3_row, slack
    return io + w


def critic_td3_forward(state, action, params, *, tile_b=1024):
    """Fused Critic_TD3 MLP. state: (B, S) f32, action: (B, A) f32 -> (B, 1)."""
    B, state_dim = state.shape
    action_dim = action.shape[-1]
    hidden = params["w2"].shape[0]

    # --- Tile selection -----------------------------------------------------
    tile_b = max(8, _round_up(tile_b, 8))
    # Balanced tiles: padding waste bounded to <8 rows per tile.
    n_tiles = pl.cdiv(B, tile_b)
    # Keep >=2 grid steps when batch allows so both v7x TensorCores get work.
    if n_tiles == 1 and B > 8:
        n_tiles = 2
    tb = _round_up(pl.cdiv(B, n_tiles), 8)
    Bp = n_tiles * tb
    if Bp != B:
        state = jnp.pad(state, ((0, Bp - B), (0, 0)))
        action = jnp.pad(action, ((0, Bp - B), (0, 0)))

    grid = (n_tiles,)
    resident = lambda i: (0, 0)  # weights/biases stay VMEM-resident across grid

    in_specs = [
        pl.BlockSpec((tb, state_dim), lambda i: (i, 0)),        # state tile
        pl.BlockSpec((tb, action_dim), lambda i: (i, 0)),       # action tile
        pl.BlockSpec((state_dim, hidden), resident),            # W1_s (bf16)
        pl.BlockSpec((action_dim, hidden), resident),           # W1_a (bf16)
        pl.BlockSpec((1, hidden), resident),                    # b1 (f32)
        pl.BlockSpec((hidden, hidden), resident),               # W2 (bf16)
        pl.BlockSpec((1, hidden), resident),                    # b2 (f32)
        pl.BlockSpec((1, hidden), resident),                    # W3 row (f32)
        pl.BlockSpec(memory_space=pltpu.MemorySpace.SMEM),      # b3 scalar
    ]
    out_specs = pl.BlockSpec((tb, 1), lambda i: (i, 0))

    # Raise scoped VMEM only when big tiles would hit v5e's 16 MiB default.
    vmem_est = _vmem_block_bytes(tb, state_dim, action_dim, hidden)
    vmem_limit = None
    if vmem_est > (12 << 20):
        vmem_limit = int(min(vmem_est + (16 << 20), 96 << 20))

    in_dim = state_dim + action_dim
    flops = 2 * Bp * (in_dim * hidden + hidden * hidden + hidden)
    bytes_accessed = (state.size + action.size + Bp) * 4 + sum(
        int(params[k].size) * params[k].dtype.itemsize
        for k in ("w1_s", "w1_a", "w2", "w3_row", "b1", "b2", "b3"))

    out = pl.pallas_call(
        _critic_td3_kernel,
        out_shape=jax.ShapeDtypeStruct((Bp, 1), jnp.float32),
        grid=grid,
        in_specs=in_specs,
        out_specs=out_specs,
        compiler_params=pltpu.CompilerParams(
            dimension_semantics=("parallel",),
            vmem_limit_bytes=vmem_limit),
        cost_estimate=pl.CostEstimate(
            flops=flops, transcendentals=0, bytes_accessed=bytes_accessed),
    )(state, action, params["w1_s"], params["w1_a"], params["b1"],
      params["w2"], params["b2"], params["w3_row"], params["b3"])

    return out[:B] if Bp != B else out


def init_params(key, state_dim, action_dim, hidden=HIDDEN, init_w=0.003,
                weight_dtype=jnp.bfloat16):
    """PyTorch-style init. Weights stored (in_features, out_features); layer-1
    weight split into state/action halves (kernel avoids the concat); output
    weight stored as a (1, hidden) row for the VPU reduce head.
    Hidden layers ~ U(-1/sqrt(fan_in), 1/sqrt(fan_in)); out layer ~ U(-init_w, init_w)."""
    ks = jax.random.split(key, 6)

    def uniform(k, shape, bound, dtype=jnp.float32):
        return jax.random.uniform(k, shape, jnp.float32, -bound, bound).astype(dtype)

    in_dim = state_dim + action_dim
    b_h1 = 1.0 / float(in_dim) ** 0.5
    b_h2 = 1.0 / float(hidden) ** 0.5
    w1 = uniform(ks[0], (in_dim, hidden), b_h1, weight_dtype)
    return {
        "w1_s": w1[:state_dim],
        "w1_a": w1[state_dim:],
        "b1": uniform(ks[1], (1, hidden), b_h1),
        "w2": uniform(ks[2], (hidden, hidden), b_h2, weight_dtype),
        "b2": uniform(ks[3], (1, hidden), b_h2),
        "w3_row": uniform(ks[4], (1, hidden), init_w),   # f32, used on the VPU
        "b3": uniform(ks[5], (1,), init_w),
    }


def _ref_forward(state, action, params):
    """Pure-JAX reference (f32 math on the bf16-rounded stored weights)."""
    w1 = jnp.concatenate([params["w1_s"], params["w1_a"]], axis=0).astype(jnp.float32)
    w2 = params["w2"].astype(jnp.float32)
    w3 = params["w3_row"].astype(jnp.float32).T
    x = jnp.concatenate([state, action], axis=-1)
    h1 = jnp.maximum(x @ w1 + params["b1"], 0.0)
    h2 = jnp.maximum(h1 @ w2 + params["b2"], 0.0)
    return h2 @ w3 + params["b3"][0]


if __name__ == "__main__":
    key = jax.random.PRNGKey(0)
    k_state, k_action, k_params, k_s2, k_a2 = jax.random.split(key, 5)

    batch = 2
    state_dim = 12
    action_dim = 4

    params = init_params(k_params, state_dim, action_dim)

    # Small-batch check (single padded tile).
    state = jax.random.normal(k_state, (batch, state_dim), jnp.float32)
    action = jax.random.normal(k_action, (batch, action_dim), jnp.float32)
    q = critic_td3_forward(state, action, params)
    jax.block_until_ready(q)
    q_ref = _ref_forward(state, action, params)
    assert q.shape == (batch, 1)
    assert jnp.allclose(q, q_ref, atol=5e-3, rtol=5e-2), "small-batch mismatch"

    # Larger batch exercises the multi-step grid + balanced-tile padding path.
    big = 1000
    state_b = jax.random.normal(k_s2, (big, state_dim), jnp.float32)
    action_b = jax.random.normal(k_a2, (big, action_dim), jnp.float32)
    q_b = critic_td3_forward(state_b, action_b, params)
    jax.block_until_ready(q_b)
    q_b_ref = _ref_forward(state_b, action_b, params)
    assert q_b.shape == (big, 1)
    assert jnp.allclose(q_b, q_b_ref, atol=5e-3, rtol=5e-2), "big-batch mismatch"

    print("KERNEL_OK")
</pallas_src>

<mosaic_0001>
module attributes {stable_mosaic.version = 11 : i64} {
  func.func @_critic_td3_kernel(%arg0: i32, %arg1: memref<8x12xf32, #tpu.memory_space<vmem>>, %arg2: memref<8x4xf32, #tpu.memory_space<vmem>>, %arg3: memref<12x128xbf16, #tpu.memory_space<vmem>>, %arg4: memref<4x128xbf16, #tpu.memory_space<vmem>>, %arg5: memref<1x128xf32, #tpu.memory_space<vmem>>, %arg6: memref<128x128xbf16, #tpu.memory_space<vmem>>, %arg7: memref<1x128xf32, #tpu.memory_space<vmem>>, %arg8: memref<1x128xf32, #tpu.memory_space<vmem>>, %arg9: memref<1xf32, #tpu.memory_space<smem>>, %arg10: memref<8x1xf32, #tpu.memory_space<vmem>>) attributes {dimension_semantics = [#tpu.dimension_semantics<parallel>], iteration_bounds = array<i64: 1>, scalar_prefetch = 0 : i64, scratch_operands = 0 : i64, tpu.core_type = #tpu.core_type<tc>, window_params = [{transform_indices = @transform_0, window_bounds = array<i64: 8, 12>}, {transform_indices = @transform_1, window_bounds = array<i64: 8, 4>}, {pipeline_mode = #tpu.pipeline_mode<synchronous>, transform_indices = @transform_2, window_bounds = array<i64: 12, 128>}, {pipeline_mode = #tpu.pipeline_mode<synchronous>, transform_indices = @transform_3, window_bounds = array<i64: 4, 128>}, {pipeline_mode = #tpu.pipeline_mode<synchronous>, transform_indices = @transform_4, window_bounds = array<i64: 1, 128>}, {pipeline_mode = #tpu.pipeline_mode<synchronous>, transform_indices = @transform_5, window_bounds = array<i64: 128, 128>}, {pipeline_mode = #tpu.pipeline_mode<synchronous>, transform_indices = @transform_6, window_bounds = array<i64: 1, 128>}, {pipeline_mode = #tpu.pipeline_mode<synchronous>, transform_indices = @transform_7, window_bounds = array<i64: 1, 128>}, {transform_indices = @transform_8, window_bounds = array<i64: 1>}, {transform_indices = @transform_9, window_bounds = array<i64: 8, 1>}]} {
    %c0 = arith.constant 0 : index
    %c0_0 = arith.constant 0 : index
    %0 = vector.load %arg1[%c0, %c0_0] : memref<8x12xf32, #tpu.memory_space<vmem>>, vector<8x12xf32>
    %1 = arith.truncf %0 : vector<8x12xf32> to vector<8x12xbf16>
    %c0_1 = arith.constant 0 : index
    %c0_2 = arith.constant 0 : index
    %2 = vector.load %arg2[%c0_1, %c0_2] : memref<8x4xf32, #tpu.memory_space<vmem>>, vector<8x4xf32>
    %3 = arith.truncf %2 : vector<8x4xf32> to vector<8x4xbf16>
    %c0_3 = arith.constant 0 : index
    %c0_4 = arith.constant 0 : index
    %4 = vector.load %arg3[%c0_3, %c0_4] : memref<12x128xbf16, #tpu.memory_space<vmem>>, vector<12x128xbf16>
    %cst = arith.constant dense<0.000000e+00> : vector<8x128xf32>
    %5 = tpu.matmul %1, %4, %cst {dimension_numbers = #tpu.dot_dimension_numbers<[1], [0], [0], [1], [0, 0, 1, 1], [], []>} : vector<8x12xbf16>, vector<12x128xbf16>, vector<8x128xf32> -> vector<8x128xf32>
    %c0_5 = arith.constant 0 : index
    %c0_6 = arith.constant 0 : index
    %6 = vector.load %arg4[%c0_5, %c0_6] : memref<4x128xbf16, #tpu.memory_space<vmem>>, vector<4x128xbf16>
    %cst_7 = arith.constant dense<0.000000e+00> : vector<8x128xf32>
    %7 = tpu.matmul %3, %6, %cst_7 {dimension_numbers = #tpu.dot_dimension_numbers<[1], [0], [0], [1], [0, 0, 1, 1], [], []>} : vector<8x4xbf16>, vector<4x128xbf16>, vector<8x128xf32> -> vector<8x128xf32>
    %8 = arith.addf %5, %7 : vector<8x128xf32>
    %c0_8 = arith.constant 0 : index
    %c0_9 = arith.constant 0 : index
    %9 = vector.load %arg5[%c0_8, %c0_9] : memref<1x128xf32, #tpu.memory_space<vmem>>, vector<1x128xf32>
    %10 = vector.broadcast %9 : vector<1x128xf32> to vector<8x128xf32>
    %11 = arith.addf %8, %10 : vector<8x128xf32>
    %cst_10 = arith.constant 0.000000e+00 : f32
    %12 = vector.broadcast %cst_10 : f32 to vector<8x128xf32>
    %13 = arith.maximumf %11, %12 : vector<8x128xf32>
    %14 = arith.truncf %13 : vector<8x128xf32> to vector<8x128xbf16>
    %c0_11 = arith.constant 0 : index
    %c0_12 = arith.constant 0 : index
    %15 = vector.load %arg6[%c0_11, %c0_12] : memref<128x128xbf16, #tpu.memory_space<vmem>>, vector<128x128xbf16>
    %cst_13 = arith.constant dense<0.000000e+00> : vector<8x128xf32>
    %16 = tpu.matmul %14, %15, %cst_13 {dimension_numbers = #tpu.dot_dimension_numbers<[1], [0], [0], [1], [0, 0, 1, 1], [], []>} : vector<8x128xbf16>, vector<128x128xbf16>, vector<8x128xf32> -> vector<8x128xf32>
    %c0_14 = arith.constant 0 : index
    %c0_15 = arith.constant 0 : index
    %17 = vector.load %arg7[%c0_14, %c0_15] : memref<1x128xf32, #tpu.memory_space<vmem>>, vector<1x128xf32>
    %18 = vector.broadcast %17 : vector<1x128xf32> to vector<8x128xf32>
    %19 = arith.addf %16, %18 : vector<8x128xf32>
    %cst_16 = arith.constant 0.000000e+00 : f32
    %20 = vector.broadcast %cst_16 : f32 to vector<8x128xf32>
    %21 = arith.maximumf %19, %20 : vector<8x128xf32>
    %c0_17 = arith.constant 0 : index
    %c0_18 = arith.constant 0 : index
    %22 = vector.load %arg8[%c0_17, %c0_18] : memref<1x128xf32, #tpu.memory_space<vmem>>, vector<1x128xf32>
    %23 = vector.broadcast %22 : vector<1x128xf32> to vector<8x128xf32>
    %24 = arith.mulf %21, %23 : vector<8x128xf32>
    %cst_19 = arith.constant dense<0.000000e+00> : vector<8xf32>
    %25 = vector.multi_reduction <add>, %24, %cst_19 [1] : vector<8x128xf32> to vector<8xf32>
    %26 = vector.shape_cast %25 : vector<8xf32> to vector<8x1xf32>
    %c0_20 = arith.constant 0 : index
    %27 = memref.load %arg9[%c0_20] : memref<1xf32, #tpu.memory_space<smem>>
    %28 = vector.broadcast %27 : f32 to vector<8x1xf32>
    %29 = arith.addf %26, %28 : vector<8x1xf32>
    %c0_21 = arith.constant 0 : index
    %c0_22 = arith.constant 0 : index
    %30 = vector.load %arg10[%c0_21, %c0_22] : memref<8x1xf32, #tpu.memory_space<vmem>>, vector<8x1xf32>
    tpu.vector_store %arg10[%c0_21, %c0_22], %29 {strides = array<i32>} : memref<8x1xf32, #tpu.memory_space<vmem>>, vector<8x1xf32>,
    return
  }
  func.func @transform_0(%arg0: i32) -> (i32, i32) {
    %c0_i32 = arith.constant 0 : i32
    %c0_i32_0 = arith.constant 0 : i32
    return %arg0, %c0_i32 : i32, i32
  }
  func.func @transform_1(%arg0: i32) -> (i32, i32) {
    %c0_i32 = arith.constant 0 : i32
    %c0_i32_0 = arith.constant 0 : i32
    return %arg0, %c0_i32 : i32, i32
  }
  func.func @transform_2(%arg0: i32) -> (i32, i32) {
    %c0_i32 = arith.constant 0 : i32
    %c0_i32_0 = arith.constant 0 : i32
    %c0_i32_1 = arith.constant 0 : i32
    return %c0_i32, %c0_i32_0 : i32, i32
  }
  func.func @transform_3(%arg0: i32) -> (i32, i32) {
    %c0_i32 = arith.constant 0 : i32
    %c0_i32_0 = arith.constant 0 : i32
    %c0_i32_1 = arith.constant 0 : i32
    return %c0_i32, %c0_i32_0 : i32, i32
  }
  func.func @transform_4(%arg0: i32) -> (i32, i32) {
    %c0_i32 = arith.constant 0 : i32
    %c0_i32_0 = arith.constant 0 : i32
    %c0_i32_1 = arith.constant 0 : i32
    return %c0_i32, %c0_i32_0 : i32, i32
  }
  func.func @transform_5(%arg0: i32) -> (i32, i32) {
    %c0_i32 = arith.constant 0 : i32
    %c0_i32_0 = arith.constant 0 : i32
    %c0_i32_1 = arith.constant 0 : i32
    return %c0_i32, %c0_i32_0 : i32, i32
  }
  func.func @transform_6(%arg0: i32) -> (i32, i32) {
    %c0_i32 = arith.constant 0 : i32
    %c0_i32_0 = arith.constant 0 : i32
    %c0_i32_1 = arith.constant 0 : i32
    return %c0_i32, %c0_i32_0 : i32, i32
  }
  func.func @transform_7(%arg0: i32) -> (i32, i32) {
    %c0_i32 = arith.constant 0 : i32
    %c0_i32_0 = arith.constant 0 : i32
    %c0_i32_1 = arith.constant 0 : i32
    return %c0_i32, %c0_i32_0 : i32, i32
  }
  func.func @transform_8(%arg0: i32) -> i32 {
    %c0_i32 = arith.constant 0 : i32
    %c0_i32_0 = arith.constant 0 : i32
    return %c0_i32 : i32
  }
  func.func @transform_9(%arg0: i32) -> (i32, i32) {
    %c0_i32 = arith.constant 0 : i32
    %c0_i32_0 = arith.constant 0 : i32
    return %arg0, %c0_i32 : i32, i32
  }
}

</mosaic_0001>

<llo_original>
// kernel: tpu_custom_call.1
$region0: #{tpu_custom_call.1}
  #allocation0 [shape = 'u32[]', space=smem, size = 0x4, offset = 0x4, fixed_abs, tag = 'smem constant byte address 0x4 - core index']
  #allocation1 [shape = 'u32[144,128]{1,0:T(1,128)}', space=vmem, size = 0x12000, scoped, tag = 'internal scratch']
  #allocation2 [shape = 'f32[1]{0:T(128)S(6)}', space=smem, size = 0x200, scoped, tag = 'scoped memory for tpu_custom_call.1']
  %s0 = inlined_call_operand.vmem [shape: f32[8,12], index: 0, kind: input, shape index: {}]
  %s1 = inlined_call_operand.vmem [shape: f32[8,4], index: 1, kind: input, shape index: {}]
  %s2 = inlined_call_operand.vmem [shape: bf16[12,128], index: 2, kind: input, shape index: {}]
  %s3 = inlined_call_operand.vmem [shape: bf16[4,128], index: 3, kind: input, shape index: {}]
  %s4 = inlined_call_operand.vmem [shape: f32[1,128], index: 4, kind: input, shape index: {}]
  %s5 = inlined_call_operand.hbm [shape: bf16[128,128], index: 5, kind: input, shape index: {}]
  %s6 = inlined_call_operand.vmem [shape: f32[1,128], index: 6, kind: input, shape index: {}]
  %s7 = inlined_call_operand.vmem [shape: f32[1,128], index: 7, kind: input, shape index: {}]
  %s8 = inlined_call_operand.<no memory space> [shape: f32[1], index: 8, kind: input, shape index: {}]
  %s9 = inlined_call_operand.vmem [shape: f32[8,1], index: 9, kind: output, shape index: {}]
  %s10 = sld [smem:[#allocation0]]
  $region50: #{tpu_custom_call.1} parent=0
    _
  %s12 = ssub.s32 1, %s10
  %s13 = scalar_select 0, %s12, %s10
  %14 = sst [smem:[#allocation2]] %s8
  $region1: #{tpu_custom_call.1} parent=0
    #allocation3 [shape = 'u8[32768]{0}', space=vmem, size = 0x8000, scoped, tag = 'input window, operand 5, single buffered']
    #allocation4 [shape = 's32[1]{0}', space=sflag, size = 0x4, scoped, tag = 'scoped memory for tpu_custom_call.1']
    %15 = vsyncpa [#allocation4], 0
    // Predicated region
    $region2: #{tpu_custom_call.1} parent=1 // pred_check
      _
    $region3: #{tpu_custom_call.1} parent=1 // pred_check_branch
      %17 = sbr.rel (0) target = $region5
    $region4: #{tpu_custom_call.1} parent=1 // pred_region
      _
    $region5: #{tpu_custom_call.1} parent=1 // pred_fallthru
      _
    // Predicated region
    $region6: #{tpu_custom_call.1} parent=1 // pred_check
      _
    $region7: #{tpu_custom_call.1} parent=1 // pred_check_branch
      %19 = sbr.rel (0) target = $region9
    $region8: #{tpu_custom_call.1} parent=1 // pred_region
      _
    $region9: #{tpu_custom_call.1} parent=1 // pred_fallthru
      _
    // Predicated region
    $region10: #{tpu_custom_call.1} parent=1 // pred_check
      _
    $region11: #{tpu_custom_call.1} parent=1 // pred_check_branch
      %21 = sbr.rel (0) target = $region13
    $region12: #{tpu_custom_call.1} parent=1 // pred_region
      _
    $region13: #{tpu_custom_call.1} parent=1 // pred_fallthru
      _
    // Predicated region
    $region14: #{tpu_custom_call.1} parent=1 // pred_check
      _
    $region15: #{tpu_custom_call.1} parent=1 // pred_check_branch
      %23 = sbr.rel (0) target = $region17
    $region16: #{tpu_custom_call.1} parent=1 // pred_region
      _
    $region17: #{tpu_custom_call.1} parent=1 // pred_fallthru
      _
    // Predicated region
    $region18: #{tpu_custom_call.1} parent=1 // pred_check
      _
    $region19: #{tpu_custom_call.1} parent=1 // pred_check_branch
      %25 = sbr.rel (0) target = $region21
    $region20: #{tpu_custom_call.1} parent=1 // pred_region
      _
    $region21: #{tpu_custom_call.1} parent=1 // pred_fallthru
      _
    // Predicated region
    $region22: #{tpu_custom_call.1} parent=1 // pred_check
      _
    $region23: #{tpu_custom_call.1} parent=1 // pred_check_branch
      %27 = sbr.rel (0) target = $region25
    $region24: #{tpu_custom_call.1} parent=1 // pred_region
      %s29 = ssub.s32 1024, 1024
      %30 = vsyncadd [#allocation4], %s29
      %s31 = sshll.u32 [#allocation3], 4
      %s32 = int_to_ptr.vmem [resolvable:$true] %s31
      %37 = dma.hbm_to_vmem [thread:$0]  %s5, 1024, %s32, [#allocation4], 64, 64, 4
    $region25: #{tpu_custom_call.1} parent=1 // pred_fallthru
      _
    // Predicated region
    $region26: #{tpu_custom_call.1} parent=1 // pred_check
      _
    $region27: #{tpu_custom_call.1} parent=1 // pred_check_branch
      %39 = sbr.rel (0) target = $region29
    $region28: #{tpu_custom_call.1} parent=1 // pred_region
      _
    $region29: #{tpu_custom_call.1} parent=1 // pred_fallthru
      _
    // Predicated region
    $region30: #{tpu_custom_call.1} parent=1 // pred_check
      _
    $region31: #{tpu_custom_call.1} parent=1 // pred_check_branch
      %41 = sbr.rel (0) target = $region33
    $region32: #{tpu_custom_call.1} parent=1 // pred_region
      _
    $region33: #{tpu_custom_call.1} parent=1 // pred_fallthru
      _
    // Predicated region
    $region34: #{tpu_custom_call.1} parent=1 // pred_check
      _
    $region35: #{tpu_custom_call.1} parent=1 // pred_check_branch
      %43 = sbr.rel (0) target = $region37
    $region36: #{tpu_custom_call.1} parent=1 // pred_region
      _
    $region37: #{tpu_custom_call.1} parent=1 // pred_fallthru
      _
    // Predicated region
    $region38: #{tpu_custom_call.1} parent=1 // pred_check
      _
    $region39: #{tpu_custom_call.1} parent=1 // pred_check_branch
      %45 = sbr.rel (0) target = $region41
    $region40: #{tpu_custom_call.1} parent=1 // pred_region
      %46 = dma.done [#allocation4], 1024
    $region41: #{tpu_custom_call.1} parent=1 // pred_fallthru
      _
    %v48 = vld [vmem:[%s0] sm:$0xff]
    %v49 = vpack.c.bf16 %v48, %v48
    %v50 = vld [vmem:[%s1] sm:$0xff]
    %v51 = vpack.c.bf16 %v50, %v50
    %v52 = vld [vmem:[%s2] sm:$0xf]
    %v53 = vld [vmem:[%s2 + $0x4] sm:$0x3]
    %v54 = vld [vmem:[%s3] sm:$0x3]
    %vm55 = vcmask 31744
    %v57 = vsel %vm55, %v51, 0
    %vm59 = vcmask 1041408
    %v61 = vsel %vm59, %v54, 0
    %63 = vmatprep.subr.bf16.mxu0 0
    %64 = vmatpush1.bf16.msra.mxu0 %v61
    %65 = vmatprep.subr.bf16.mxu0 0
    %66 = vmatpush1.bf16.msra.mxu0 0
    %67 = vmatprep.subr.bf16.mxu0 0
    %68 = vmatpush1.bf16.msra.mxu0 0
    %69 = vmatprep.subr.bf16.mxu0 0
    %70 = vmatpush1.bf16.msra.mxu0 0
    %71 = vmatprep.subr.bf16.mxu0 0
    %72 = vmatpush1.bf16.msra.mxu0 0
    %73 = vmatprep.subr.bf16.mxu0 0
    %74 = vmatpush1.bf16.msra.mxu0 0
    %75 = vmatprep.subr.bf16.mxu0 0
    %76 = vmatpush1.bf16.msra.mxu0 0
    %77 = vmatprep.subr.bf16.mxu0 0
    %78 = vmatpush1.bf16.msra.mxu0 0
    %79 = vmatprep.subr.bf16.mxu0 0
    %80 = vmatpush1.bf16.msra.mxu0 0
    %81 = vmatprep.subr.bf16.mxu0 0
    %82 = vmatpush1.bf16.msra.mxu0 0
    %83 = vmatprep.subr.bf16.mxu0 0
    %84 = vmatpush1.bf16.msra.mxu0 0
    %85 = vmatprep.subr.bf16.mxu0 0
    %86 = vmatpush1.bf16.msra.mxu0 0
    %87 = vmatprep.subr.bf16.mxu0 0
    %88 = vmatpush1.bf16.msra.mxu0 0
    %89 = vmatprep.subr.bf16.mxu0 0
    %90 = vmatpush1.bf16.msra.mxu0 0
    %91 = vmatprep.subr.bf16.mxu0 0
    %92 = vmatpush1.bf16.msra.mxu0 0
    %93 = vmatprep.subr.bf16.mxu0 0
    %94 = vmatpush1.bf16.msra.mxu0 0
    %95 = vmatprep.mubr.bf16.mxu0 0
    %96 = vmatmul.mubr.bf16.gmra.mrb[0].mxu0 %v57
    %v97 = vpop.f32.mrb[0].mxu0
    %v98 = vadd.f32 0.0, %v97
    %v99 = vpop.f32.mrb[0].mxu0
    %v100 = vpop.f32.mrb[0].mxu0
    %v101 = vpop.f32.mrb[0].mxu0
    %102 = vdwg.mxu0
    %v105 = vunpack.c.l.b16 %v52
    %v106 = vunpack.c.l.b16 %v53
    %v107 = vpack.c.b16 %v106, %v105
    %vm108 = vcmask 97280
    %v110 = vsel %vm108, %v49, 0
    %vm112 = vcmask 1045504
    %v114 = vsel %vm112, %v107, 0
    %116 = vmatprep.subr.bf16.mxu0 0
    %117 = vmatpush1.bf16.msra.mxu0 %v114
    %118 = vmatprep.subr.bf16.mxu0 0
    %119 = vmatpush1.bf16.msra.mxu0 0
    %120 = vmatprep.subr.bf16.mxu0 0
    %121 = vmatpush1.bf16.msra.mxu0 0
    %122 = vmatprep.subr.bf16.mxu0 0
    %123 = vmatpush1.bf16.msra.mxu0 0
    %124 = vmatprep.subr.bf16.mxu0 0
    %125 = vmatpush1.bf16.msra.mxu0 0
    %126 = vmatprep.subr.bf16.mxu0 0
    %127 = vmatpush1.bf16.msra.mxu0 0
    %128 = vmatprep.subr.bf16.mxu0 0
    %129 = vmatpush1.bf16.msra.mxu0 0
    %130 = vmatprep.subr.bf16.mxu0 0
    %131 = vmatpush1.bf16.msra.mxu0 0
    %132 = vmatprep.subr.bf16.mxu0 0
    %133 = vmatpush1.bf16.msra.mxu0 0
    %134 = vmatprep.subr.bf16.mxu0 0
    %135 = vmatpush1.bf16.msra.mxu0 0
    %136 = vmatprep.subr.bf16.mxu0 0
    %137 = vmatpush1.bf16.msra.mxu0 0
    %138 = vmatprep.subr.bf16.mxu0 0
    %139 = vmatpush1.bf16.msra.mxu0 0
    %140 = vmatprep.subr.bf16.mxu0 0
    %141 = vmatpush1.bf16.msra.mxu0 0
    %142 = vmatprep.subr.bf16.mxu0 0
    %143 = vmatpush1.bf16.msra.mxu0 0
    %144 = vmatprep.subr.bf16.mxu0 0
    %145 = vmatpush1.bf16.msra.mxu0 0
    %146 = vmatprep.subr.bf16.mxu0 0
    %147 = vmatpush1.bf16.msra.mxu0 0
    %148 = vmatprep.mubr.bf16.mxu0 0
    %149 = vmatmul.mubr.bf16.gmra.mrb[0].mxu0 %v110
    %v150 = vpop.f32.mrb[0].mxu0
    %v151 = vadd.f32 %v98, %v150
    %v152 = vpop.f32.mrb[0].mxu0
    %v153 = vpop.f32.mrb[0].mxu0
    %v154 = vpop.f32.mrb[0].mxu0
    %155 = vdwg.mxu0
    %v156 = vld [vmem:[%s4] sm:$0x1]
    %v158 = vlaneseq
    %v159 = vshrl.u32 %v158, 7
    %v160 = vsub.s32 0, %v159
    %v161 = vrot.slane %v156, %v160
    %v163 = vadd.f32 %v151, %v161
    %v164 = vmax.f32 %v163, 0.0
    %v165 = vpack.c.bf16 %v164, %v164
    %v166 = vld [vmem:[#allocation3] sm:$0xf]
    %v167 = vld [vmem:[#allocation3 + $0x4] sm:$0xf]
    %v168 = vld [vmem:[#allocation3 + $0x8] sm:$0xf]
    %v169 = vld [vmem:[#allocation3 + $0xc] sm:$0xf]
    %v170 = vld [vmem:[#allocation3 + $0x10] sm:$0xf]
    %v171 = vld [vmem:[#allocation3 + $0x14] sm:$0xf]
    %v172 = vld [vmem:[#allocation3 + $0x18] sm:$0xf]
    %v173 = vld [vmem:[#allocation3 + $0x1c] sm:$0xf]
    %v174 = vld [vmem:[#allocation3 + $0x20] sm:$0xf]
    %v175 = vld [vmem:[#allocation3 + $0x24] sm:$0xf]
    %v176 = vld [vmem:[#allocation3 + $0x28] sm:$0xf]
    %v177 = vld [vmem:[#allocation3 + $0x2c] sm:$0xf]
    %v178 = vld [vmem:[#allocation3 + $0x30] sm:$0xf]
    %v179 = vld [vmem:[#allocation3 + $0x34] sm:$0xf]
    %v180 = vld [vmem:[#allocation3 + $0x38] sm:$0xf]
    %v181 = vld [vmem:[#allocation3 + $0x3c] sm:$0xf]
    %v182 = vld [vmem:[%s6] sm:$0x1]
    %v184 = vlaneseq
    %v185 = vshrl.u32 %v184, 7
    %v186 = vsub.s32 0, %v185
    %v187 = vrot.slane %v182, %v186
    %v205 = vunpack.c.l.b16 %v166
    %v206 = vunpack.c.l.b16 %v167
    %v207 = vunpack.c.l.b16 %v168
    %v208 = vunpack.c.l.b16 %v169
    %v209 = vunpack.c.l.b16 %v170
    %v210 = vunpack.c.l.b16 %v171
    %v211 = vunpack.c.l.b16 %v172
    %v212 = vunpack.c.l.b16 %v173
    %v213 = vunpack.c.l.b16 %v174
    %v214 = vunpack.c.l.b16 %v175
    %v215 = vunpack.c.l.b16 %v176
    %v216 = vunpack.c.l.b16 %v177
    %v217 = vunpack.c.l.b16 %v178
    %v218 = vunpack.c.l.b16 %v179
    %v219 = vunpack.c.l.b16 %v180
    %v220 = vunpack.c.l.b16 %v181
    %v221 = vpack.c.b16 %v206, %v205
    %v222 = vpack.c.b16 %v208, %v207
    %v223 = vpack.c.b16 %v210, %v209
    %v224 = vpack.c.b16 %v212, %v211
    %v225 = vpack.c.b16 %v214, %v213
    %v226 = vpack.c.b16 %v216, %v215
    %v227 = vpack.c.b16 %v218, %v217
    %v228 = vpack.c.b16 %v220, %v219
    %237 = vmatprep.subr.bf16.mxu0 0
    %238 = vmatpush1.bf16.msra.mxu0 %v221
    %239 = vmatprep.subr.bf16.mxu0 0
    %240 = vmatpush1.bf16.msra.mxu0 %v222
    %241 = vmatprep.subr.bf16.mxu0 0
    %242 = vmatpush1.bf16.msra.mxu0 %v223
    %243 = vmatprep.subr.bf16.mxu0 0
    %244 = vmatpush1.bf16.msra.mxu0 %v224
    %245 = vmatprep.subr.bf16.mxu0 0
    %246 = vmatpush1.bf16.msra.mxu0 %v225
    %247 = vmatprep.subr.bf16.mxu0 0
    %248 = vmatpush1.bf16.msra.mxu0 %v226
    %249 = vmatprep.subr.bf16.mxu0 0
    %250 = vmatpush1.bf16.msra.mxu0 %v227
    %251 = vmatprep.subr.bf16.mxu0 0
    %252 = vmatpush1.bf16.msra.mxu0 %v228
    %253 = vmatprep.subr.bf16.mxu0 0
    %254 = vmatpush1.bf16.msra.mxu0 0
    %255 = vmatprep.subr.bf16.mxu0 0
    %256 = vmatpush1.bf16.msra.mxu0 0
    %257 = vmatprep.subr.bf16.mxu0 0
    %258 = vmatpush1.bf16.msra.mxu0 0
    %259 = vmatprep.subr.bf16.mxu0 0
    %260 = vmatpush1.bf16.msra.mxu0 0
    %261 = vmatprep.subr.bf16.mxu0 0
    %262 = vmatpush1.bf16.msra.mxu0 0
    %263 = vmatprep.subr.bf16.mxu0 0
    %264 = vmatpush1.bf16.msra.mxu0 0
    %265 = vmatprep.subr.bf16.mxu0 0
    %266 = vmatpush1.bf16.msra.mxu0 0
    %267 = vmatprep.subr.bf16.mxu0 0
    %268 = vmatpush1.bf16.msra.mxu0 0
    %269 = vmatprep.mubr.bf16.mxu0 0
    %270 = vmatmul.mubr.bf16.gmra.mrb[0].mxu0 %v165
    %v271 = vpop.f32.mrb[0].mxu0
    %v272 = vadd.f32 %v187, %v271
    %v273 = vpop.f32.mrb[0].mxu0
    %v274 = vpop.f32.mrb[0].mxu0
    %v275 = vpop.f32.mrb[0].mxu0
    %276 = vdwg.mxu0
    %v277 = vmax.f32 %v272, 0.0
    %v278 = vld [vmem:[%s7] sm:$0x1]
    %v280 = vlaneseq
    %v281 = vshrl.u32 %v280, 7
    %v282 = vsub.s32 0, %v281
    %v283 = vrot.slane %v278, %v282
    %v285 = vmul.f32 %v277, %v283
    %286 = vadd.xlane.f32.xlu0 %v285
    %v287 = vpop.xlane.xlu0 %286
    %s288 = sld [smem:[#allocation2]]
    %v289 = vstv %s288
    %v290 = vadd.f32 %v287, %v289
    %vm291 = vcmask 7168
    %292 = vst.msk [vmem:[%s9] sm:$0xff] %vm291, %v290
    // Predicated region
    $region42: #{tpu_custom_call.1} parent=1 // pred_check
      _
    $region43: #{tpu_custom_call.1} parent=1 // pred_check_branch
      %294 = sbr.rel (0) target = $region45
    $region44: #{tpu_custom_call.1} parent=1 // pred_region
      _
    $region45: #{tpu_custom_call.1} parent=1 // pred_fallthru
      _
    // Predicated region
    $region46: #{tpu_custom_call.1} parent=1 // pred_check
      _
    $region47: #{tpu_custom_call.1} parent=1 // pred_check_branch
      %296 = sbr.rel (0) target = $region49
    $region48: #{tpu_custom_call.1} parent=1 // pred_region
      _
    $region49: #{tpu_custom_call.1} parent=1 // pred_fallthru
      _
    %297 = vsyncpa [#allocation4], 1

</llo_original>
